<compile_context>
chip_gen: v5e
topology: v5e:2x2
jax: 0.10.0
libtpu: 0.0.40
codegen_flags: <defaults>
</compile_context>

<pallas_src>
import math

import jax
import jax.numpy as jnp
from jax import lax
from jax.experimental import pallas as pl
from jax.experimental.pallas import tpu as pltpu


def _round_up(x, m):
    return ((x + m - 1) // m) * m


def _linear_single_kernel(x_ref, w_ref, b_ref, o_ref):
    # x_ref: (B, K) VMEM, w_ref: (N, K) VMEM (native layout), b_ref: (1, N),
    # o_ref: (B, N).  Contract on K (last dim of both operands).
    acc = lax.dot_general(
        x_ref[...], w_ref[...],
        dimension_numbers=(((1,), (1,)), ((), ())),
        preferred_element_type=jnp.float32)
    o_ref[...] = acc + b_ref[...]


def _linear_ktiled_kernel(x_ref, w_ref, b_ref, o_ref):
    # x_ref: (B, tk), w_ref: (N, tk), b_ref: (1, N), o_ref: (B, N) resident
    # across the K-reduction grid (same output block every step).
    @pl.when(pl.program_id(0) == 0)
    def _():
        o_ref[...] = jnp.broadcast_to(b_ref[...], o_ref.shape)

    o_ref[...] += lax.dot_general(
        x_ref[...], w_ref[...],
        dimension_numbers=(((1,), (1,)), ((), ())),
        preferred_element_type=jnp.float32)


def simple_model_forward(x_nchw, weight, bias, *, tk_max=8192):
    """Forward pass of SimpleModel.

    x_nchw: (B, 3, size, size) float32
    weight: (10, 3*size*size) float32   (native PyTorch nn.Linear layout)
    bias:   (10,) float32
    returns (B, 10) float32
    """
    B = x_nchw.shape[0]
    K = x_nchw.shape[1] * x_nchw.shape[2] * x_nchw.shape[3]
    N = weight.shape[0]

    # Flatten exactly like nn.Flatten on a contiguous NCHW tensor.
    x2d = jnp.reshape(x_nchw, (B, K))
    b2d = jnp.reshape(bias, (1, N))

    # Choose the K tile: lane-aligned (multiple of 128), capped at tk_max so
    # double-buffered tiles fit every generation's scoped-VMEM default.
    if K <= tk_max:
        tk = _round_up(K, 128)
    else:
        tk = _round_up(tk_max, 128)
    k_total = _round_up(K, tk)
    nk = k_total // tk

    if k_total != K:
        # Zero-pad the contraction dim (contributes nothing to the matmul).
        x2d = jnp.pad(x2d, ((0, 0), (0, k_total - K)))
        w2d = jnp.pad(weight, ((0, 0), (0, k_total - K)))
    else:
        w2d = weight

    cost = pl.CostEstimate(
        flops=2 * B * k_total * N,
        transcendentals=0,
        bytes_accessed=4 * (B * k_total + N * k_total + B * N + N),
    )

    if nk == 1:
        # Single-tile path: no grid, no pipeline machinery — whole arrays in
        # VMEM, one MXU matmul + bias add.
        return pl.pallas_call(
            _linear_single_kernel,
            out_shape=jax.ShapeDtypeStruct((B, N), jnp.float32),
            in_specs=[
                pl.BlockSpec(memory_space=pltpu.MemorySpace.VMEM),
                pl.BlockSpec(memory_space=pltpu.MemorySpace.VMEM),
                pl.BlockSpec(memory_space=pltpu.MemorySpace.VMEM),
            ],
            out_specs=pl.BlockSpec(memory_space=pltpu.MemorySpace.VMEM),
            cost_estimate=cost,
        )(x2d, w2d, b2d)

    # K-tiled reduction path: double-buffered weight/x tiles stream from HBM
    # while the MXU accumulates into the resident (B, N) output block.
    return pl.pallas_call(
        _linear_ktiled_kernel,
        out_shape=jax.ShapeDtypeStruct((B, N), jnp.float32),
        grid_spec=pltpu.PrefetchScalarGridSpec(
            num_scalar_prefetch=0,
            grid=(nk,),
            in_specs=[
                pl.BlockSpec((B, tk), lambda k: (0, k)),
                pl.BlockSpec((N, tk), lambda k: (0, k)),
                pl.BlockSpec((1, N), lambda k: (0, 0)),
            ],
            out_specs=pl.BlockSpec((B, N), lambda k: (0, 0)),
        ),
        compiler_params=pltpu.CompilerParams(
            dimension_semantics=("arbitrary",)),
        cost_estimate=cost,
    )(x2d, w2d, b2d)


def init_params(key, size):
    """Deterministic init mimicking torch.nn.Linear default (uniform +-1/sqrt(fan_in))."""
    in_features = 3 * size * size
    out_features = 10
    kw, kb = jax.random.split(key)
    bound = 1.0 / math.sqrt(in_features)
    weight = jax.random.uniform(
        kw, (out_features, in_features), jnp.float32, minval=-bound, maxval=bound)
    bias = jax.random.uniform(
        kb, (out_features,), jnp.float32, minval=-bound, maxval=bound)
    return weight, bias


if __name__ == "__main__":
    key = jax.random.PRNGKey(0)
    k_x, k_p = jax.random.split(key)

    batch, size = 2, 16
    x = jax.random.normal(k_x, (batch, 3, size, size), jnp.float32)
    weight, bias = init_params(k_p, size)

    ref = jnp.reshape(x, (batch, -1)) @ weight.T + bias

    # Default path: K=768 fits one tile -> no-grid, no-pipeline kernel.
    out = jax.block_until_ready(simple_model_forward(x, weight, bias))
    assert out.shape == (batch, 10)
    assert jnp.allclose(out, ref, atol=1e-4, rtol=1e-4)

    # Force the K-tiled reduction path (tk=256, nk=3) to exercise the
    # streaming/accumulate kernel used for large `size`.
    out_tiled = jax.block_until_ready(
        simple_model_forward(x, weight, bias, tk_max=256))
    assert jnp.allclose(out_tiled, ref, atol=1e-4, rtol=1e-4)

    print("KERNEL_OK")
</pallas_src>

<mosaic_0001>
module attributes {stable_mosaic.version = 11 : i64} {
  func.func @_linear_single_kernel(%arg0: memref<2x768xf32, #tpu.memory_space<vmem>>, %arg1: memref<10x768xf32, #tpu.memory_space<vmem>>, %arg2: memref<1x10xf32, #tpu.memory_space<vmem>>, %arg3: memref<2x10xf32, #tpu.memory_space<vmem>>) attributes {dimension_semantics = [], scalar_prefetch = 0 : i64, scratch_operands = 0 : i64, tpu.core_type = #tpu.core_type<tc>} {
    %c0 = arith.constant 0 : index
    %c0_0 = arith.constant 0 : index
    %0 = vector.load %arg0[%c0, %c0_0] : memref<2x768xf32, #tpu.memory_space<vmem>>, vector<2x768xf32>
    %c0_1 = arith.constant 0 : index
    %c0_2 = arith.constant 0 : index
    %1 = vector.load %arg1[%c0_1, %c0_2] : memref<10x768xf32, #tpu.memory_space<vmem>>, vector<10x768xf32>
    %cst = arith.constant dense<0.000000e+00> : vector<2x10xf32>
    %2 = tpu.matmul %0, %1, %cst {dimension_numbers = #tpu.dot_dimension_numbers<[1], [1], [0], [0], [0, 0, 1, 0], [], []>} : vector<2x768xf32>, vector<10x768xf32>, vector<2x10xf32> -> vector<2x10xf32>
    %c0_3 = arith.constant 0 : index
    %c0_4 = arith.constant 0 : index
    %3 = vector.load %arg2[%c0_3, %c0_4] : memref<1x10xf32, #tpu.memory_space<vmem>>, vector<1x10xf32>
    %4 = vector.broadcast %3 : vector<1x10xf32> to vector<2x10xf32>
    %5 = arith.addf %2, %4 : vector<2x10xf32>
    %c0_5 = arith.constant 0 : index
    %c0_6 = arith.constant 0 : index
    %6 = vector.load %arg3[%c0_5, %c0_6] : memref<2x10xf32, #tpu.memory_space<vmem>>, vector<2x10xf32>
    tpu.vector_store %arg3[%c0_5, %c0_6], %5 {strides = array<i32>} : memref<2x10xf32, #tpu.memory_space<vmem>>, vector<2x10xf32>,
    return
  }
}

</mosaic_0001>

<llo_original>
// kernel: tpu_custom_call.1
$region0: #{tpu_custom_call.1}
  #allocation0 [shape = 'u32[]', space=smem, size = 0x4, offset = 0x4, fixed_abs, tag = 'smem constant byte address 0x4 - core index']
  #allocation1 [shape = 'u32[72,128]{1,0:T(1,128)}', space=vmem, size = 0x9000, scoped, tag = 'internal scratch']
  %s0 = inlined_call_operand.hbm [shape: f32[2,768], index: 0, kind: input, shape index: {}]
  %s1 = inlined_call_operand.hbm [shape: f32[10,768], index: 1, kind: input, shape index: {}]
  %s2 = inlined_call_operand.vmem [shape: f32[1,10], index: 2, kind: input, shape index: {}]
  %s3 = inlined_call_operand.hbm [shape: f32[2,10], index: 3, kind: output, shape index: {}]
  %s4 = sld [smem:[#allocation0]]
  $region30: #{tpu_custom_call.1} parent=0
    _
  %s6 = ssub.s32 1, %s4
  %s7 = scalar_select 0, %s6, %s4
  $region1: #{tpu_custom_call.1} parent=0
    #allocation2 [shape = 'u8[6144]{0}', space=vmem, size = 0x1800, scoped, tag = 'input window, operand 0, single buffered']
    #allocation3 [shape = 's32[1]{0}', space=sflag, size = 0x4, scoped, tag = 'scoped memory for tpu_custom_call.1']
    #allocation4 [shape = 's32[1]{0}', space=sflag, size = 0x4, scoped, tag = 'scoped memory for tpu_custom_call.1']
    #allocation5 [shape = 'u8[49152]{0}', space=vmem, size = 0xc000, scoped, tag = 'input window, operand 1, single buffered']
    #allocation6 [shape = 's32[1]{0}', space=sflag, size = 0x4, scoped, tag = 'scoped memory for tpu_custom_call.1']
    #allocation7 [shape = 'u8[1024]{0}', space=vmem, size = 0x400, scoped, tag = 'output window, operand 0, single buffered']
    %8 = vsyncpa [#allocation3], 0
    %9 = vsyncpa [#allocation6], 0
    %10 = vsyncpa [#allocation4], 0
    // Predicated region
    $region2: #{tpu_custom_call.1} parent=1 // pred_check
      _
    $region3: #{tpu_custom_call.1} parent=1 // pred_check_branch
      %12 = sbr.rel (0) target = $region5
    $region4: #{tpu_custom_call.1} parent=1 // pred_region
      %14 = vsyncadd [#allocation3], 0
      %s16 = sshll.u32 %s0, 4
      %s17 = int_to_ptr.hbm [resolvable:$true] %s16
      %s18 = sshll.u32 [#allocation2], 4
      %s19 = int_to_ptr.vmem [resolvable:$true] %s18
      %21 = dma.hbm_to_vmem [thread:$0]  %s17, 192, %s19, [#allocation3]
    $region5: #{tpu_custom_call.1} parent=1 // pred_fallthru
      _
    // Predicated region
    $region6: #{tpu_custom_call.1} parent=1 // pred_check
      _
    $region7: #{tpu_custom_call.1} parent=1 // pred_check_branch
      %23 = sbr.rel (0) target = $region9
    $region8: #{tpu_custom_call.1} parent=1 // pred_region
      %25 = vsyncadd [#allocation6], 0
      %s26 = sshll.u32 %s1, 4
      %s27 = int_to_ptr.hbm [resolvable:$true] %s26
      %s28 = sshll.u32 [#allocation5], 4
      %s29 = int_to_ptr.vmem [resolvable:$true] %s28
      %34 = dma.hbm_to_vmem [thread:$0]  %s27, 1536, %s29, [#allocation6], 768, 768, 48
    $region9: #{tpu_custom_call.1} parent=1 // pred_fallthru
      _
    // Predicated region
    $region10: #{tpu_custom_call.1} parent=1 // pred_check
      _
    $region11: #{tpu_custom_call.1} parent=1 // pred_check_branch
      %36 = sbr.rel (0) target = $region13
    $region12: #{tpu_custom_call.1} parent=1 // pred_region
      _
    $region13: #{tpu_custom_call.1} parent=1 // pred_fallthru
      _
    // Predicated region
    $region14: #{tpu_custom_call.1} parent=1 // pred_check
      _
    $region15: #{tpu_custom_call.1} parent=1 // pred_check_branch
      %38 = sbr.rel (0) target = $region17
    $region16: #{tpu_custom_call.1} parent=1 // pred_region
      %40 = dma.done [#allocation3], 192
    $region17: #{tpu_custom_call.1} parent=1 // pred_fallthru
      _
    // Predicated region
    $region18: #{tpu_custom_call.1} parent=1 // pred_check
      _
    $region19: #{tpu_custom_call.1} parent=1 // pred_check_branch
      %42 = sbr.rel (0) target = $region21
    $region20: #{tpu_custom_call.1} parent=1 // pred_region
      %44 = dma.done [#allocation6], 1536
    $region21: #{tpu_custom_call.1} parent=1 // pred_fallthru
      _
    %v45 = vld [vmem:[#allocation2] sm:$0xff]
    %v46 = vld [vmem:[#allocation2 + $0x8] sm:$0xf]
    %v47 = vld [vmem:[#allocation5] sm:$0xff]
    %v48 = vld [vmem:[#allocation5 + $0x8] sm:$0xff]
    %v49 = vld [vmem:[#allocation5 + $0x10] sm:$0xff]
    %v50 = vld [vmem:[#allocation5 + $0x18] sm:$0xff]
    %v51 = vld [vmem:[#allocation5 + $0x20] sm:$0xff]
    %v52 = vld [vmem:[#allocation5 + $0x28] sm:$0xff]
    %v53 = vld [vmem:[#allocation5 + $0x30] sm:$0x3]
    %v54 = vld [vmem:[#allocation5 + $0x38] sm:$0x3]
    %v55 = vld [vmem:[#allocation5 + $0x40] sm:$0x3]
    %v56 = vld [vmem:[#allocation5 + $0x48] sm:$0x3]
    %v57 = vld [vmem:[#allocation5 + $0x50] sm:$0x3]
    %v58 = vld [vmem:[#allocation5 + $0x58] sm:$0x3]
    %v59 = vld [vmem:[%s2] sm:$0x1]
    %v61 = vperm.slane %v59, 0
    %65 = vst [vmem:[#allocation1] ss:$4 sm:$0xff] %v45
    %s66 = scalar_lea.vmem [#allocation1], 32
    %67 = vst [vmem:[%s66] ss:$4 sm:$0xff] %v46
    %v68 = vld.sshfl [vmem:[#allocation1] sm:$0xff pattern:$0x73625140]
    %v69 = vld.sshfl [vmem:[#allocation1 + $0x8] sm:$0xff pattern:$0x73625140]
    %v70 = vld.sshfl [vmem:[#allocation1 + $0x10] sm:$0xff pattern:$0x73625140]
    %v71 = vld.sshfl [vmem:[#allocation1 + $0x18] sm:$0xff pattern:$0x73625140]
    %v72 = vld.sshfl [vmem:[#allocation1 + $0x20] sm:$0xff pattern:$0x73625140]
    %v73 = vld.sshfl [vmem:[#allocation1 + $0x28] sm:$0xff pattern:$0x73625140]
    %80 = vmatpush.xpose.msra.mxu0 0.0
    %81 = vmatpush.xpose.msra.mxu0 0.0
    %82 = vmatpush.xpose.msra.mxu0 0.0
    %83 = vmatpush.xpose.msra.mxu0 0.0
    %84 = vmatpush.xpose.msra.mxu0 0.0
    %85 = vmatpush.xpose.msra.mxu0 0.0
    %86 = vmatpush.xpose.msra.mxu0 0.0
    %87 = vmatpush.xpose.msra.mxu0 0.0
    %88 = vmatpush.xpose.msra.mxu0 0.0
    %89 = vmatpush.xpose.msra.mxu0 0.0
    %90 = vmatpush.xpose.msra.mxu0 0.0
    %91 = vmatpush.xpose.msra.mxu0 0.0
    %92 = vmatpush.xpose.msra.mxu0 0.0
    %93 = vmatpush.xpose.msra.mxu0 0.0
    %94 = vmatpush.xpose.msra.mxu0 %v53
    %95 = vmatpush.xpose.msra.mxu0 %v47
    %96 = vmatmul.f32.gmra.mxu0 %v68
    %v97 = vpop.f32.mrf.mxu0
    %v98 = vadd.f32 %v61, %v97
    %99 = vdwg.mxu0
    %100 = vmatpush.xpose.msra.mxu0 0.0
    %101 = vmatpush.xpose.msra.mxu0 0.0
    %102 = vmatpush.xpose.msra.mxu0 0.0
    %103 = vmatpush.xpose.msra.mxu0 0.0
    %104 = vmatpush.xpose.msra.mxu0 0.0
    %105 = vmatpush.xpose.msra.mxu0 0.0
    %106 = vmatpush.xpose.msra.mxu0 0.0
    %107 = vmatpush.xpose.msra.mxu0 0.0
    %108 = vmatpush.xpose.msra.mxu0 0.0
    %109 = vmatpush.xpose.msra.mxu0 0.0
    %110 = vmatpush.xpose.msra.mxu0 0.0
    %111 = vmatpush.xpose.msra.mxu0 0.0
    %112 = vmatpush.xpose.msra.mxu0 0.0
    %113 = vmatpush.xpose.msra.mxu0 0.0
    %114 = vmatpush.xpose.msra.mxu0 %v54
    %115 = vmatpush.xpose.msra.mxu0 %v48
    %116 = vmatmul.f32.gmra.mxu0 %v69
    %v117 = vpop.f32.mrf.mxu0
    %v118 = vadd.f32 %v98, %v117
    %119 = vdwg.mxu0
    %120 = vmatpush.xpose.msra.mxu0 0.0
    %121 = vmatpush.xpose.msra.mxu0 0.0
    %122 = vmatpush.xpose.msra.mxu0 0.0
    %123 = vmatpush.xpose.msra.mxu0 0.0
    %124 = vmatpush.xpose.msra.mxu0 0.0
    %125 = vmatpush.xpose.msra.mxu0 0.0
    %126 = vmatpush.xpose.msra.mxu0 0.0
    %127 = vmatpush.xpose.msra.mxu0 0.0
    %128 = vmatpush.xpose.msra.mxu0 0.0
    %129 = vmatpush.xpose.msra.mxu0 0.0
    %130 = vmatpush.xpose.msra.mxu0 0.0
    %131 = vmatpush.xpose.msra.mxu0 0.0
    %132 = vmatpush.xpose.msra.mxu0 0.0
    %133 = vmatpush.xpose.msra.mxu0 0.0
    %134 = vmatpush.xpose.msra.mxu0 %v55
    %135 = vmatpush.xpose.msra.mxu0 %v49
    %136 = vmatmul.f32.gmra.mxu0 %v70
    %v137 = vpop.f32.mrf.mxu0
    %v138 = vadd.f32 %v118, %v137
    %139 = vdwg.mxu0
    %140 = vmatpush.xpose.msra.mxu0 0.0
    %141 = vmatpush.xpose.msra.mxu0 0.0
    %142 = vmatpush.xpose.msra.mxu0 0.0
    %143 = vmatpush.xpose.msra.mxu0 0.0
    %144 = vmatpush.xpose.msra.mxu0 0.0
    %145 = vmatpush.xpose.msra.mxu0 0.0
    %146 = vmatpush.xpose.msra.mxu0 0.0
    %147 = vmatpush.xpose.msra.mxu0 0.0
    %148 = vmatpush.xpose.msra.mxu0 0.0
    %149 = vmatpush.xpose.msra.mxu0 0.0
    %150 = vmatpush.xpose.msra.mxu0 0.0
    %151 = vmatpush.xpose.msra.mxu0 0.0
    %152 = vmatpush.xpose.msra.mxu0 0.0
    %153 = vmatpush.xpose.msra.mxu0 0.0
    %154 = vmatpush.xpose.msra.mxu0 %v56
    %155 = vmatpush.xpose.msra.mxu0 %v50
    %156 = vmatmul.f32.gmra.mxu0 %v71
    %v157 = vpop.f32.mrf.mxu0
    %v158 = vadd.f32 %v138, %v157
    %159 = vdwg.mxu0
    %160 = vmatpush.xpose.msra.mxu0 0.0
    %161 = vmatpush.xpose.msra.mxu0 0.0
    %162 = vmatpush.xpose.msra.mxu0 0.0
    %163 = vmatpush.xpose.msra.mxu0 0.0
    %164 = vmatpush.xpose.msra.mxu0 0.0
    %165 = vmatpush.xpose.msra.mxu0 0.0
    %166 = vmatpush.xpose.msra.mxu0 0.0
    %167 = vmatpush.xpose.msra.mxu0 0.0
    %168 = vmatpush.xpose.msra.mxu0 0.0
    %169 = vmatpush.xpose.msra.mxu0 0.0
    %170 = vmatpush.xpose.msra.mxu0 0.0
    %171 = vmatpush.xpose.msra.mxu0 0.0
    %172 = vmatpush.xpose.msra.mxu0 0.0
    %173 = vmatpush.xpose.msra.mxu0 0.0
    %174 = vmatpush.xpose.msra.mxu0 %v57
    %175 = vmatpush.xpose.msra.mxu0 %v51
    %176 = vmatmul.f32.gmra.mxu0 %v72
    %v177 = vpop.f32.mrf.mxu0
    %v178 = vadd.f32 %v158, %v177
    %179 = vdwg.mxu0
    %180 = vmatpush.xpose.msra.mxu0 0.0
    %181 = vmatpush.xpose.msra.mxu0 0.0
    %182 = vmatpush.xpose.msra.mxu0 0.0
    %183 = vmatpush.xpose.msra.mxu0 0.0
    %184 = vmatpush.xpose.msra.mxu0 0.0
    %185 = vmatpush.xpose.msra.mxu0 0.0
    %186 = vmatpush.xpose.msra.mxu0 0.0
    %187 = vmatpush.xpose.msra.mxu0 0.0
    %188 = vmatpush.xpose.msra.mxu0 0.0
    %189 = vmatpush.xpose.msra.mxu0 0.0
    %190 = vmatpush.xpose.msra.mxu0 0.0
    %191 = vmatpush.xpose.msra.mxu0 0.0
    %192 = vmatpush.xpose.msra.mxu0 0.0
    %193 = vmatpush.xpose.msra.mxu0 0.0
    %194 = vmatpush.xpose.msra.mxu0 %v58
    %195 = vmatpush.xpose.msra.mxu0 %v52
    %196 = vmatmul.f32.gmra.mxu0 %v73
    %v197 = vpop.f32.mrf.mxu0
    %v198 = vadd.f32 %v178, %v197
    %199 = vdwg.mxu0
    %vm200 = vcmask 74752
    %201 = vst.msk [vmem:[#allocation7] sm:$0x3] %vm200, %v198
    // Predicated region
    $region22: #{tpu_custom_call.1} parent=1 // pred_check
      _
    $region23: #{tpu_custom_call.1} parent=1 // pred_check_branch
      %203 = sbr.rel (0) target = $region25
    $region24: #{tpu_custom_call.1} parent=1 // pred_region
      %205 = vsyncadd [#allocation4], 0
      %s207 = sshll.u32 [#allocation7], 4
      %s208 = int_to_ptr.vmem [resolvable:$true] %s207
      %s209 = sshll.u32 %s3, 4
      %s210 = int_to_ptr.hbm [resolvable:$true] %s209
      %212 = dma.vmem_to_hbm [thread:$0]  %s208, 32, %s210, [#allocation4]
    $region25: #{tpu_custom_call.1} parent=1 // pred_fallthru
      _
    // Predicated region
    $region26: #{tpu_custom_call.1} parent=1 // pred_check
      _
    $region27: #{tpu_custom_call.1} parent=1 // pred_check_branch
      %214 = sbr.rel (0) target = $region29
    $region28: #{tpu_custom_call.1} parent=1 // pred_region
      %216 = dma.done [#allocation4], 32
    $region29: #{tpu_custom_call.1} parent=1 // pred_fallthru
      _
    %217 = vsyncpa [#allocation3], 1
    %218 = vsyncpa [#allocation6], 1
    %219 = vsyncpa [#allocation4], 1

</llo_original>
